<compile_context>
chip_gen: v7x
topology: tpu7x:2x2x1
jax: 0.10.0
libtpu: 0.0.40
codegen_flags: <defaults>
</compile_context>

<pallas_src>
import functools

import jax
import jax.numpy as jnp
from jax.experimental import pallas as pl
from jax.experimental.pallas import tpu as pltpu


def _round_up(v, m):
    return ((v + m - 1) // m) * m


# ---------------------------------------------------------------------------
# Kernel 1: h1 = dinv * relu( (dinv * (A @ x_scaled)) @ W1 + b1 )
#   x_scaled already carries the column-side D^{-1/2};
#   the trailing dinv is layer 2's column normalization folded in.
# grid = (row tiles i, compacted K steps k); f32 accumulator scratch.
# ---------------------------------------------------------------------------
def _conv1_kernel(kmap_ref, counts_ref, adj_ref, x_ref, drow_ref, w1_ref,
                  b1_ref, h1_ref, acc_ref, *, nb, blk, feat_resident):
    i = pl.program_id(0)
    k = pl.program_id(1)

    @pl.when(k == 0)
    def _():
        acc_ref[...] = jnp.zeros_like(acc_ref)

    # Only accumulate real (non-empty) adjacency blocks; padded steps repeat
    # the previous block index, so their DMA is skipped by the pipeline.
    @pl.when(k < counts_ref[i])
    def _():
        if feat_resident:
            kk = kmap_ref[i * nb + k]
            off = pl.multiple_of(kk * blk, blk)
            z = x_ref[pl.ds(off, blk), :]
        else:
            z = x_ref[...]
        acc_ref[...] += jnp.dot(adj_ref[...], z,
                                preferred_element_type=jnp.float32)

    @pl.when(k == pl.num_programs(1) - 1)
    def _():
        agg = (acc_ref[...] * drow_ref[...]).astype(jnp.bfloat16)
        h = jnp.dot(agg, w1_ref[...], preferred_element_type=jnp.float32)
        h = jnp.maximum(h + b1_ref[...], 0.0)
        # layer-2 column norm folded in (dinv >= 0; padded rows have dinv == 0
        # so padded h1 rows are exactly zero).
        h1_ref[...] = (h * drow_ref[...]).astype(h1_ref.dtype)


# ---------------------------------------------------------------------------
# Kernel 2: out = (dinv * (A @ h1)) @ W2' + b'      (fc already fused into W2')
# ---------------------------------------------------------------------------
def _conv2_kernel(kmap_ref, counts_ref, adj_ref, h1_ref, drow_ref, w2_ref,
                  b2_ref, o_ref, acc_ref, *, nb, blk, feat_resident):
    i = pl.program_id(0)
    k = pl.program_id(1)

    @pl.when(k == 0)
    def _():
        acc_ref[...] = jnp.zeros_like(acc_ref)

    @pl.when(k < counts_ref[i])
    def _():
        if feat_resident:
            kk = kmap_ref[i * nb + k]
            off = pl.multiple_of(kk * blk, blk)
            z = h1_ref[pl.ds(off, blk), :]
        else:
            z = h1_ref[...]
        acc_ref[...] += jnp.dot(adj_ref[...], z,
                                preferred_element_type=jnp.float32)

    @pl.when(k == pl.num_programs(1) - 1)
    def _():
        agg = (acc_ref[...] * drow_ref[...]).astype(jnp.bfloat16)
        out = jnp.dot(agg, w2_ref[...], preferred_element_type=jnp.float32)
        o_ref[...] = (out + b2_ref[...]).astype(o_ref.dtype)


def gcn_forward(x, edge_index, params, *, blk=None):
    """x: (N, Fin) f32; edge_index: (2, E) int32 (row 0 = src, row 1 = dst).

    params = (w1, b1, w2, b2, wfc_t, bfc), f32
             (wfc_t is the nn.Linear weight pre-transposed: out = h @ wfc_t + bfc).
    """
    N, fin = x.shape
    w1, b1, w2, b2, wfc_t, bfc = params
    hid = w1.shape[1]
    out_f = w2.shape[1]

    # Tile heuristic: bigger tiles amortize per-step overhead / hit HBM roofline,
    # but keep >= 2 row tiles so both v7x TensorCores get work.
    if blk is None:
        blk = 1024 if N > 4096 else 512 if N > 2048 else 256 if N > 256 else 128
    np_ = _round_up(N, blk)
    nb = np_ // blk
    fin_p = _round_up(fin, 128)      # lane-dense conv1 feature / accumulator
    hid_p = _round_up(hid, 128)      # lane-dense hidden features
    out_p = _round_up(out_f, 128)    # lane-dense output (unmasked vst)

    # ---- glue (plain JAX, O(N^2) only for the single bf16 adjacency) ----
    loops = jnp.arange(N, dtype=edge_index.dtype)
    src = jnp.concatenate([edge_index[0], loops])     # self-loops in the scatter
    dst = jnp.concatenate([edge_index[1], loops])

    # bf16 adjacency built directly (edge multiplicities assumed small integers,
    # so bf16 accumulation is exact).
    adj = jnp.zeros((np_, np_), jnp.bfloat16).at[dst, src].add(
        jnp.asarray(1.0, jnp.bfloat16))

    deg = jnp.zeros((np_,), jnp.float32).at[dst].add(1.0)
    dinv = jnp.where(deg > 0, jax.lax.rsqrt(jnp.maximum(deg, 1.0)), 0.0)
    dinv = dinv.reshape(np_, 1)                        # padded rows -> 0

    # Block occupancy -> per-row-tile compacted K indices + counts.
    bi = (dst // blk).astype(jnp.int32)
    bj = (src // blk).astype(jnp.int32)
    occ = jnp.zeros((nb, nb), jnp.int32).at[bi, bj].add(1) > 0
    cols = jnp.arange(nb, dtype=jnp.int32)[None, :]
    sort_key = jnp.where(occ, cols, cols + nb)         # occupied ks first, ascending
    order = jnp.argsort(sort_key, axis=1).astype(jnp.int32)
    counts = occ.sum(axis=1).astype(jnp.int32)         # >= 1 (diagonal self-loops)
    last = jnp.take_along_axis(order, jnp.maximum(counts - 1, 0)[:, None], axis=1)
    kmap = jnp.where(cols < counts[:, None], order, last).astype(jnp.int32)
    kmap1 = kmap.reshape(-1)                           # flat SMEM-friendly layout

    # x with the layer-1 column-side D^{-1/2} folded in; lane-padded.
    xs = x.astype(jnp.float32) * dinv[:N]
    xp = jnp.zeros((np_, fin_p), jnp.bfloat16).at[:N, :fin].set(xs.astype(jnp.bfloat16))

    # fc fused into conv2 (exact algebra, done in f32 before the bf16 cast).
    w2f = w2.astype(jnp.float32) @ wfc_t.astype(jnp.float32)
    b2f = b2.reshape(1, -1).astype(jnp.float32) @ wfc_t.astype(jnp.float32) \
        + bfc.reshape(1, -1).astype(jnp.float32)

    w1p = jnp.zeros((fin_p, hid_p), jnp.bfloat16).at[:fin, :hid].set(w1.astype(jnp.bfloat16))
    b1p = jnp.zeros((1, hid_p), jnp.float32).at[:, :hid].set(b1.reshape(1, hid))
    w2p = jnp.zeros((hid_p, out_p), jnp.bfloat16).at[:hid, :out_f].set(w2f.astype(jnp.bfloat16))
    b2p = jnp.zeros((1, out_p), jnp.float32).at[:, :out_f].set(b2f)

    grid = (nb, nb)
    cparams = pltpu.CompilerParams(
        dimension_semantics=("parallel", "arbitrary"),
        vmem_limit_bytes=48 * 1024 * 1024,
    )

    adj_spec = pl.BlockSpec((blk, blk), lambda i, k, km, ct: (i, km[i * nb + k]))
    drow_spec = pl.BlockSpec((blk, 1), lambda i, k, km, ct: (i, 0))
    const = lambda shape: pl.BlockSpec(shape, lambda i, k, km, ct: (0, 0))

    # Keep the gathered-feature operand fully resident in VMEM when it fits.
    RESIDENT_BYTES = 12 * 1024 * 1024
    x_res = np_ * fin_p * 2 <= RESIDENT_BYTES
    h1_res = np_ * hid_p * 2 <= RESIDENT_BYTES
    x_spec = const((np_, fin_p)) if x_res else pl.BlockSpec(
        (blk, fin_p), lambda i, k, km, ct: (km[i * nb + k], 0))
    h1_spec = const((np_, hid_p)) if h1_res else pl.BlockSpec(
        (blk, hid_p), lambda i, k, km, ct: (km[i * nb + k], 0))

    # ---- layer 1 ----
    h1 = pl.pallas_call(
        functools.partial(_conv1_kernel, nb=nb, blk=blk, feat_resident=x_res),
        out_shape=jax.ShapeDtypeStruct((np_, hid_p), jnp.bfloat16),
        grid_spec=pltpu.PrefetchScalarGridSpec(
            num_scalar_prefetch=2,
            grid=grid,
            in_specs=[adj_spec, x_spec, drow_spec,
                      const((fin_p, hid_p)), const((1, hid_p))],
            out_specs=pl.BlockSpec((blk, hid_p), lambda i, k, km, ct: (i, 0)),
            scratch_shapes=[pltpu.VMEM((blk, fin_p), jnp.float32)],
        ),
        compiler_params=cparams,
    )(kmap1, counts, adj, xp, dinv, w1p, b1p)

    # ---- layer 2 (+ fused fc) ----
    out = pl.pallas_call(
        functools.partial(_conv2_kernel, nb=nb, blk=blk, feat_resident=h1_res),
        out_shape=jax.ShapeDtypeStruct((np_, out_p), jnp.float32),
        grid_spec=pltpu.PrefetchScalarGridSpec(
            num_scalar_prefetch=2,
            grid=grid,
            in_specs=[adj_spec, h1_spec, drow_spec,
                      const((hid_p, out_p)), const((1, out_p))],
            out_specs=pl.BlockSpec((blk, out_p), lambda i, k, km, ct: (i, 0)),
            scratch_shapes=[pltpu.VMEM((blk, hid_p), jnp.float32)],
        ),
        compiler_params=cparams,
    )(kmap1, counts, adj, h1, dinv, w2p, b2p)

    return out[:N, :out_f]


def init_params(key, in_features, hidden_dim, out_features):
    k1, k2, k3, k4 = jax.random.split(key, 4)

    def glorot(k, fan_in, fan_out):               # GCNConv: glorot weight, zero bias
        lim = jnp.sqrt(6.0 / (fan_in + fan_out))
        return jax.random.uniform(k, (fan_in, fan_out), jnp.float32, -lim, lim)

    w1 = glorot(k1, in_features, hidden_dim)
    b1 = jnp.zeros((1, hidden_dim), jnp.float32)
    w2 = glorot(k2, hidden_dim, out_features)
    b2 = jnp.zeros((1, out_features), jnp.float32)
    lim = 1.0 / jnp.sqrt(out_features)            # nn.Linear(out, out)
    wfc = jax.random.uniform(k3, (out_features, out_features), jnp.float32, -lim, lim)
    bfc = jax.random.uniform(k4, (1, out_features), jnp.float32, -lim, lim)
    return (w1, b1, w2, b2, wfc.T, bfc)           # wfc pre-transposed


def _reference(x, edge_index, params):
    """Plain-JAX f32 reference of the same forward pass."""
    N = x.shape[0]
    w1, b1, w2, b2, wfc_t, bfc = params
    src, dst = edge_index[0], edge_index[1]
    adj = jnp.zeros((N, N), jnp.float32).at[dst, src].add(1.0)
    adj = adj + jnp.eye(N, dtype=jnp.float32)
    deg = jnp.sum(adj, axis=1)
    dinv = jnp.where(deg > 0, 1.0 / jnp.sqrt(deg), 0.0)
    a_hat = dinv[:, None] * adj * dinv[None, :]
    h1 = jnp.maximum(a_hat @ (x @ w1) + b1, 0.0)
    h2 = a_hat @ (h1 @ w2) + b2
    return h2 @ wfc_t + bfc


if __name__ == "__main__":
    key = jax.random.PRNGKey(0)
    kx, ke, kp = jax.random.split(key, 3)

    N = 200          # nodes (padded to 256 -> 2x2 grid, exercises accumulation)
    IN_F = 8         # in_features
    HID = 32         # hidden_dim
    OUT_F = 16       # out_features
    E = 600          # edges

    x = jax.random.normal(kx, (N, IN_F), jnp.float32)
    params = init_params(kp, IN_F, HID, OUT_F)

    # Test 1: dense random graph (all adjacency blocks occupied).
    edge_index = jax.random.randint(ke, (2, E), 0, N, jnp.int32)
    out = gcn_forward(x, edge_index, params)
    jax.block_until_ready(out)
    assert out.shape == (N, OUT_F)
    ref = _reference(x, edge_index, params)
    err = float(jnp.max(jnp.abs(out - ref)))
    assert err < 0.15, f"dense-graph max abs error {err}"   # kernel feeds the MXU bf16

    # Test 2: two disconnected clusters -> off-diagonal blocks empty, exercises
    # the block-sparse skip path (kmap padding + pl.when gating).
    ke1, ke2 = jax.random.split(ke)
    e1 = jax.random.randint(ke1, (2, E // 2), 0, 100, jnp.int32)
    e2 = jax.random.randint(ke2, (2, E // 2), 150, N, jnp.int32)
    edge_sparse = jnp.concatenate([e1, e2], axis=1)
    out_s = gcn_forward(x, edge_sparse, params)
    jax.block_until_ready(out_s)
    ref_s = _reference(x, edge_sparse, params)
    err_s = float(jnp.max(jnp.abs(out_s - ref_s)))
    assert err_s < 0.15, f"block-sparse max abs error {err_s}"

    print("KERNEL_OK")
</pallas_src>

<mosaic_0001>
module attributes {stable_mosaic.version = 11 : i64} {
  func.func @_conv1_kernel(%arg0: i32, %arg1: i32, %arg2: memref<4xi32, #tpu.memory_space<smem>>, %arg3: memref<2xi32, #tpu.memory_space<smem>>, %arg4: memref<128x128xbf16, #tpu.memory_space<vmem>>, %arg5: memref<256x128xbf16, #tpu.memory_space<vmem>>, %arg6: memref<128x1xf32, #tpu.memory_space<vmem>>, %arg7: memref<128x128xbf16, #tpu.memory_space<vmem>>, %arg8: memref<1x128xf32, #tpu.memory_space<vmem>>, %arg9: memref<128x128xbf16, #tpu.memory_space<vmem>>, %arg10: memref<128x128xf32, #tpu.memory_space<vmem>>) attributes {dimension_semantics = [#tpu.dimension_semantics<parallel>, #tpu.dimension_semantics<arbitrary>], iteration_bounds = array<i64: 2, 2>, scalar_prefetch = 2 : i64, scratch_operands = 1 : i64, tpu.core_type = #tpu.core_type<tc>, window_params = [{transform_indices = @transform_0, window_bounds = array<i64: 128, 128>}, {pipeline_mode = #tpu.pipeline_mode<synchronous>, transform_indices = @transform_1, window_bounds = array<i64: 256, 128>}, {transform_indices = @transform_2, window_bounds = array<i64: 128, 1>}, {pipeline_mode = #tpu.pipeline_mode<synchronous>, transform_indices = @transform_3, window_bounds = array<i64: 128, 128>}, {pipeline_mode = #tpu.pipeline_mode<synchronous>, transform_indices = @transform_4, window_bounds = array<i64: 1, 128>}, {transform_indices = @transform_5, window_bounds = array<i64: 128, 128>}]} {
    %c0_i32 = arith.constant 0 : i32
    %0 = arith.cmpi eq, %arg1, %c0_i32 : i32
    %1 = arith.extui %0 : i1 to i32
    %c0_i32_0 = arith.constant 0 : i32
    %2 = arith.cmpi ne, %1, %c0_i32_0 : i32
    scf.if %2 {
      %cst = arith.constant 0.000000e+00 : f32
      %11 = vector.broadcast %cst : f32 to vector<128x128xf32>
      %c0 = arith.constant 0 : index
      %c0_3 = arith.constant 0 : index
      %12 = vector.load %arg10[%c0, %c0_3] : memref<128x128xf32, #tpu.memory_space<vmem>>, vector<128x128xf32>
      tpu.vector_store %arg10[%c0, %c0_3], %11 {strides = array<i32>} : memref<128x128xf32, #tpu.memory_space<vmem>>, vector<128x128xf32>,
    } else {
    }
    %3 = arith.index_cast %arg0 : i32 to index
    %4 = memref.load %arg3[%3] : memref<2xi32, #tpu.memory_space<smem>>
    %5 = arith.cmpi slt, %arg1, %4 : i32
    %6 = arith.extui %5 : i1 to i32
    %c0_i32_1 = arith.constant 0 : i32
    %7 = arith.cmpi ne, %6, %c0_i32_1 : i32
    scf.if %7 {
      %c2_i32 = arith.constant 2 : i32
      %11 = arith.muli %arg0, %c2_i32 : i32
      %12 = arith.addi %11, %arg1 : i32
      %13 = arith.index_cast %12 : i32 to index
      %14 = memref.load %arg2[%13] : memref<4xi32, #tpu.memory_space<smem>>
      %c128_i32 = arith.constant 128 : i32
      %15 = arith.muli %14, %c128_i32 : i32
      %16 = tpu.assume_multiple %15, 128 : i32
      %17 = arith.index_cast %16 : i32 to index
      %c0 = arith.constant 0 : index
      %18 = vector.load %arg5[%17, %c0] : memref<256x128xbf16, #tpu.memory_space<vmem>>, vector<128x128xbf16>
      %c0_3 = arith.constant 0 : index
      %c0_4 = arith.constant 0 : index
      %19 = vector.load %arg10[%c0_3, %c0_4] : memref<128x128xf32, #tpu.memory_space<vmem>>, vector<128x128xf32>
      %c0_5 = arith.constant 0 : index
      %c0_6 = arith.constant 0 : index
      %20 = vector.load %arg4[%c0_5, %c0_6] : memref<128x128xbf16, #tpu.memory_space<vmem>>, vector<128x128xbf16>
      %cst = arith.constant dense<0.000000e+00> : vector<128x128xf32>
      %21 = tpu.matmul %20, %18, %cst {dimension_numbers = #tpu.dot_dimension_numbers<[1], [0], [0], [1], [0, 0, 1, 1], [], []>} : vector<128x128xbf16>, vector<128x128xbf16>, vector<128x128xf32> -> vector<128x128xf32>
      %22 = arith.addf %19, %21 : vector<128x128xf32>
      %c0_7 = arith.constant 0 : index
      %c0_8 = arith.constant 0 : index
      %23 = vector.load %arg10[%c0_7, %c0_8] : memref<128x128xf32, #tpu.memory_space<vmem>>, vector<128x128xf32>
      tpu.vector_store %arg10[%c0_7, %c0_8], %22 {strides = array<i32>} : memref<128x128xf32, #tpu.memory_space<vmem>>, vector<128x128xf32>,
    } else {
    }
    %c1_i32 = arith.constant 1 : i32
    %8 = arith.cmpi eq, %arg1, %c1_i32 : i32
    %9 = arith.extui %8 : i1 to i32
    %c0_i32_2 = arith.constant 0 : i32
    %10 = arith.cmpi ne, %9, %c0_i32_2 : i32
    scf.if %10 {
      %c0 = arith.constant 0 : index
      %c0_3 = arith.constant 0 : index
      %11 = vector.load %arg10[%c0, %c0_3] : memref<128x128xf32, #tpu.memory_space<vmem>>, vector<128x128xf32>
      %c0_4 = arith.constant 0 : index
      %c0_5 = arith.constant 0 : index
      %12 = vector.load %arg6[%c0_4, %c0_5] : memref<128x1xf32, #tpu.memory_space<vmem>>, vector<128x1xf32>
      %13 = vector.broadcast %12 : vector<128x1xf32> to vector<128x128xf32>
      %14 = arith.mulf %11, %13 : vector<128x128xf32>
      %15 = arith.truncf %14 : vector<128x128xf32> to vector<128x128xbf16>
      %c0_6 = arith.constant 0 : index
      %c0_7 = arith.constant 0 : index
      %16 = vector.load %arg7[%c0_6, %c0_7] : memref<128x128xbf16, #tpu.memory_space<vmem>>, vector<128x128xbf16>
      %cst = arith.constant dense<0.000000e+00> : vector<128x128xf32>
      %17 = tpu.matmul %15, %16, %cst {dimension_numbers = #tpu.dot_dimension_numbers<[1], [0], [0], [1], [0, 0, 1, 1], [], []>} : vector<128x128xbf16>, vector<128x128xbf16>, vector<128x128xf32> -> vector<128x128xf32>
      %c0_8 = arith.constant 0 : index
      %c0_9 = arith.constant 0 : index
      %18 = vector.load %arg8[%c0_8, %c0_9] : memref<1x128xf32, #tpu.memory_space<vmem>>, vector<1x128xf32>
      %19 = vector.broadcast %18 : vector<1x128xf32> to vector<128x128xf32>
      %20 = arith.addf %17, %19 : vector<128x128xf32>
      %cst_10 = arith.constant 0.000000e+00 : f32
      %21 = vector.broadcast %cst_10 : f32 to vector<128x128xf32>
      %22 = arith.maximumf %20, %21 : vector<128x128xf32>
      %c0_11 = arith.constant 0 : index
      %c0_12 = arith.constant 0 : index
      %23 = vector.load %arg6[%c0_11, %c0_12] : memref<128x1xf32, #tpu.memory_space<vmem>>, vector<128x1xf32>
      %24 = vector.broadcast %23 : vector<128x1xf32> to vector<128x128xf32>
      %25 = arith.mulf %22, %24 : vector<128x128xf32>
      %26 = arith.truncf %25 : vector<128x128xf32> to vector<128x128xbf16>
      %c0_13 = arith.constant 0 : index
      %c0_14 = arith.constant 0 : index
      %27 = vector.load %arg9[%c0_13, %c0_14] : memref<128x128xbf16, #tpu.memory_space<vmem>>, vector<128x128xbf16>
      tpu.vector_store %arg9[%c0_13, %c0_14], %26 {strides = array<i32>} : memref<128x128xbf16, #tpu.memory_space<vmem>>, vector<128x128xbf16>,
    } else {
    }
    return
  }
  func.func @transform_0(%arg0: i32, %arg1: i32, %arg2: memref<4xi32, #tpu.memory_space<smem>>, %arg3: memref<2xi32, #tpu.memory_space<smem>>) -> (i32, i32) {
    %c2_i32 = arith.constant 2 : i32
    %0 = arith.muli %arg0, %c2_i32 : i32
    %1 = arith.addi %0, %arg1 : i32
    %2 = arith.index_cast %1 : i32 to index
    %3 = memref.load %arg2[%2] : memref<4xi32, #tpu.memory_space<smem>>
    %c0_i32 = arith.constant 0 : i32
    return %arg0, %3 : i32, i32
  }
  func.func @transform_1(%arg0: i32, %arg1: i32, %arg2: memref<4xi32, #tpu.memory_space<smem>>, %arg3: memref<2xi32, #tpu.memory_space<smem>>) -> (i32, i32) {
    %c0_i32 = arith.constant 0 : i32
    %c0_i32_0 = arith.constant 0 : i32
    %c0_i32_1 = arith.constant 0 : i32
    return %c0_i32, %c0_i32_0 : i32, i32
  }
  func.func @transform_2(%arg0: i32, %arg1: i32, %arg2: memref<4xi32, #tpu.memory_space<smem>>, %arg3: memref<2xi32, #tpu.memory_space<smem>>) -> (i32, i32) {
    %c0_i32 = arith.constant 0 : i32
    %c0_i32_0 = arith.constant 0 : i32
    return %arg0, %c0_i32 : i32, i32
  }
  func.func @transform_3(%arg0: i32, %arg1: i32, %arg2: memref<4xi32, #tpu.memory_space<smem>>, %arg3: memref<2xi32, #tpu.memory_space<smem>>) -> (i32, i32) {
    %c0_i32 = arith.constant 0 : i32
    %c0_i32_0 = arith.constant 0 : i32
    %c0_i32_1 = arith.constant 0 : i32
    return %c0_i32, %c0_i32_0 : i32, i32
  }
  func.func @transform_4(%arg0: i32, %arg1: i32, %arg2: memref<4xi32, #tpu.memory_space<smem>>, %arg3: memref<2xi32, #tpu.memory_space<smem>>) -> (i32, i32) {
    %c0_i32 = arith.constant 0 : i32
    %c0_i32_0 = arith.constant 0 : i32
    %c0_i32_1 = arith.constant 0 : i32
    return %c0_i32, %c0_i32_0 : i32, i32
  }
  func.func @transform_5(%arg0: i32, %arg1: i32, %arg2: memref<4xi32, #tpu.memory_space<smem>>, %arg3: memref<2xi32, #tpu.memory_space<smem>>) -> (i32, i32) {
    %c0_i32 = arith.constant 0 : i32
    %c0_i32_0 = arith.constant 0 : i32
    return %arg0, %c0_i32 : i32, i32
  }
}

</mosaic_0001>

<llo_original>
// kernel: tpu_custom_call.1
$region0: #{tpu_custom_call.1}
  #allocation0 [shape = 'u32[]', space=smem, size = 0x4, offset = 0x4, fixed_abs, tag = 'smem constant byte address 0x4 - core index']
  #allocation1 [shape = 'u32[144,128]{1,0:T(1,128)}', space=vmem, size = 0x12000, scoped, tag = 'internal scratch']
  #allocation2 [shape = 'f32[128,128]{1,0:T(8,128)}', space=vmem, size = 0x10000, scoped, tag = 'scratch operand']
  #allocation3 [shape = 's32[1]{0}', space=sflag, size = 0x4, scoped, tag = 'scoped memory for tpu_custom_call.1']
  #allocation4 [shape = 'u8[512]{0}', space=smem, size = 0x200, scoped, tag = 'prefetched SMEM operand 0']
  #allocation5 [shape = 'u8[512]{0}', space=smem, size = 0x200, scoped, tag = 'prefetched SMEM operand 1']
  %s0 = inlined_call_operand.vmem [shape: s32[4], index: 0, kind: input, shape index: {}]
  %s1 = inlined_call_operand.vmem [shape: s32[2], index: 1, kind: input, shape index: {}]
  %s2 = inlined_call_operand.vmem [shape: bf16[256,256], index: 2, kind: input, shape index: {}]
  %s3 = inlined_call_operand.hbm [shape: bf16[256,128], index: 3, kind: input, shape index: {}]
  %s4 = inlined_call_operand.vmem [shape: f32[256,1], index: 4, kind: input, shape index: {}]
  %s5 = inlined_call_operand.hbm [shape: bf16[128,128], index: 5, kind: input, shape index: {}]
  %s6 = inlined_call_operand.vmem [shape: f32[1,128], index: 6, kind: input, shape index: {}]
  %s7 = inlined_call_operand.hbm [shape: bf16[256,128], index: 7, kind: output, shape index: {}]
  %s8 = sld [smem:[#allocation0]]
  $region114: #{tpu_custom_call.1} parent=0
    _
  %s10 = ssub.s32 1, %s8
  %s11 = scalar_select 0, %s10, %s8
  %s12 = sshll.u32 %s0, 4
  %s13 = int_to_ptr.vmem [resolvable:$true] %s12
  %15 = dma.vmem_to_smem %s13, 16, [#allocation4], [#allocation3]
  %s16 = sshll.u32 %s1, 4
  %s17 = int_to_ptr.vmem [resolvable:$true] %s16
  %19 = dma.vmem_to_smem %s17, 16, [#allocation5], [#allocation3]
  %20 = dma.done [#allocation3], 32
  %21 = sfence
  $region1: #{tpu_custom_call.1} parent=0
    #allocation6 [shape = 'u8[65536]{0}', space=vmem, size = 0x10000, scoped, tag = 'input window, operand 2']
    #allocation7 [shape = 'u8[65536]{0}', space=vmem, size = 0x10000, scoped, tag = 'input window, operand 3, single buffered']
    #allocation8 [shape = 's32[2]{0}', space=sflag, size = 0x8, scoped, tag = 'scoped memory for tpu_custom_call.1']
    #allocation9 [shape = 's32[2]{0}', space=sflag, size = 0x8, scoped, tag = 'scoped memory for tpu_custom_call.1']
    #allocation10 [shape = 'u8[32768]{0}', space=vmem, size = 0x8000, scoped, tag = 'input window, operand 5, single buffered']
    #allocation11 [shape = 's32[1]{0}', space=sflag, size = 0x4, scoped, tag = 'scoped memory for tpu_custom_call.1']
    #allocation12 [shape = 'u8[65536]{0}', space=vmem, size = 0x10000, scoped, tag = 'output window, operand 0']
    %22 = vsyncpa [#allocation8], 0
    %23 = vsyncpa [#allocation11], 0
    %24 = vsyncpa [#allocation9], 0
    %s25 = scalar_lea.sflag [#allocation9], 1
    %26 = vsyncpa %s25, 0
    loop: start=0, step=1, limit=6
    $region2: #{tpu_custom_call.1} parent=1 // loop_pre_header
      _
    $region3: #{tpu_custom_call.1} parent=1 // loop_header
      %s28 = sphi 0, %s32
      %p29 = scmp.ge.s32.totalorder %s28, 6
      %s35 = sphi 0, %s47
      %s36 = sphi 0, %s43
      %s37 = sphi 0, %s35
      %s38 = sphi 0, %s36
      %s39 = sphi 0, %s37
      %s40 = sphi 0, %s38
      %s58 = sphi 0, %s60
      %s61 = sphi 0, %s58
      %s62 = sphi 0, %s61
      %s78 = sphi 0, %s62
      %s82 = sphi 0, %s82
      %s84 = sphi 0, %s82
      %s85 = sphi 0, %s84
      %s99 = sphi 0, %s85
      %s105 = sphi 0, %s107
      %s108 = sphi 0, %s105
      %s109 = sphi 0, %s108
      %s125 = sphi 0, %s109
      %s129 = sphi 0, %s129
      %s131 = sphi 0, %s129
      %s132 = sphi 0, %s131
      %s146 = sphi 0, %s132
      %s150 = sphi 0, %s150
      %s152 = sphi 0, %s150
      %s153 = sphi 0, %s152
      %s167 = sphi 0, %s153
      %s173 = sphi 0, %s175
      %s176 = sphi 0, %s173
      %s177 = sphi 0, %s176
      %s193 = sphi 0, %s177
    $region4: #{tpu_custom_call.1} parent=1 // loop_header_branch
      %31 = sbr.rel (%p29) target = $region8
    $region5: #{tpu_custom_call.1} parent=1 // loop_body
      %s33 = ssub.s32 %s28, 1
      %s34 = ssub.s32 %s28, 2
      %s41 = sadd.s32 1, %s36
      %p42 = scmp.ge.s32.totalorder %s41, 2
      %s43 = scalar_select %p42, 0, %s41
      %s44 = sadd.s32 1, %s35
      %s45 = scalar_select %p42, %s44, %s35
      %p46 = scmp.ge.s32.totalorder %s45, 2
      %s47 = scalar_select %p46, 0, %s45
      %s48 = smul.u32 %s35, 2
      %s49 = sadd.s32 %s48, %s36
      %s50 = sld [smem:[#allocation4 + %s49]]
      %s51 = smul.u32 %s47, 2
      %s52 = sadd.s32 %s51, %s43
      %s53 = sld [smem:[#allocation4 + %s52]]
      %s54 = ssub.s32 %s35, %s47
      %s55 = ssub.s32 %s50, %s53
      %s56 = sor.u32 %s54, %s55
      %p57 = scmp.eq.s32.totalorder %s56, 0
      %s59 = sadd.s32 %s58, 1
      %s60 = scalar_select %p57, %s58, %s59
      %p63 = pneg %p57
      %p64 = scmp.eq.s32.totalorder %s28, 3
      %p65 = por %p63, %p64
      %p66 = scmp.ne.s32.totalorder %s58, %s61
      %p67 = scmp.eq.s32.totalorder %s28, 0
      %p68 = por %p66, %p67
      %p69 = scmp.ne.s32.totalorder %s58, %s61
      %p70 = scmp.eq.s32.totalorder %s33, 3
      %p71 = por %p69, %p70
      %p72 = scmp.ne.s32.totalorder %s61, %s62
      %p73 = scmp.eq.s32.totalorder %s33, 0
      %p74 = por %p72, %p73
      %p75 = scmp.ne.s32.totalorder %s61, %s62
      %p76 = scmp.eq.s32.totalorder %s34, 3
      %p77 = por %p75, %p76
      %p79 = scmp.ne.s32.totalorder %s62, %s78
      %p80 = scmp.eq.s32.totalorder %s34, 0
      %p81 = por %p79, %p80
      %s83 = sadd.s32 %s82, 1
      %p86 = scmp.eq.s32.totalorder %s28, 3
      %p87 = scmp.ne.s32.totalorder %s82, %s84
      %p88 = scmp.eq.s32.totalorder %s28, 0
      %p89 = por %p87, %p88
      %p90 = scmp.ne.s32.totalorder %s82, %s84
      %p91 = scmp.eq.s32.totalorder %s33, 3
      %p92 = por %p90, %p91
      %p93 = scmp.ne.s32.totalorder %s84, %s85
      %p94 = scmp.eq.s32.totalorder %s33, 0
      %p95 = por %p93, %p94
      %p96 = scmp.ne.s32.totalorder %s84, %s85
      %p97 = scmp.eq.s32.totalorder %s34, 3
      %p98 = por %p96, %p97
      %p100 = scmp.ne.s32.totalorder %s85, %s99
      %p101 = scmp.eq.s32.totalorder %s34, 0
      %p102 = por %p100, %p101
      %s103 = ssub.s32 %s35, %s47
      %p104 = scmp.eq.s32.totalorder %s103, 0
      %s106 = sadd.s32 %s105, 1
      %s107 = scalar_select %p104, %s105, %s106
      %p110 = pneg %p104
      %p111 = scmp.eq.s32.totalorder %s28, 3
      %p112 = por %p110, %p111
      %p113 = scmp.ne.s32.totalorder %s105, %s108
      %p114 = scmp.eq.s32.totalorder %s28, 0
      %p115 = por %p113, %p114
      %p116 = scmp.ne.s32.totalorder %s105, %s108
      %p117 = scmp.eq.s32.totalorder %s33, 3
      %p118 = por %p116, %p117
      %p119 = scmp.ne.s32.totalorder %s108, %s109
      %p120 = scmp.eq.s32.totalorder %s33, 0
      %p121 = por %p119, %p120
      %p122 = scmp.ne.s32.totalorder %s108, %s109
      %p123 = scmp.eq.s32.totalorder %s34, 3
      %p124 = por %p122, %p123
      %p126 = scmp.ne.s32.totalorder %s109, %s125
      %p127 = scmp.eq.s32.totalorder %s34, 0
      %p128 = por %p126, %p127
      %s130 = sadd.s32 %s129, 1
      %p133 = scmp.eq.s32.totalorder %s28, 3
      %p134 = scmp.ne.s32.totalorder %s129, %s131
      %p135 = scmp.eq.s32.totalorder %s28, 0
      %p136 = por %p134, %p135
      %p137 = scmp.ne.s32.totalorder %s129, %s131
      %p138 = scmp.eq.s32.totalorder %s33, 3
      %p139 = por %p137, %p138
      %p140 = scmp.ne.s32.totalorder %s131, %s132
      %p141 = scmp.eq.s32.totalorder %s33, 0
      %p142 = por %p140, %p141
      %p143 = scmp.ne.s32.totalorder %s131, %s132
      %p144 = scmp.eq.s32.totalorder %s34, 3
      %p145 = por %p143, %p144
      %p147 = scmp.ne.s32.totalorder %s132, %s146
      %p148 = scmp.eq.s32.totalorder %s34, 0
      %p149 = por %p147, %p148
      %s151 = sadd.s32 %s150, 1
      %p154 = scmp.eq.s32.totalorder %s28, 3
      %p155 = scmp.ne.s32.totalorder %s150, %s152
      %p156 = scmp.eq.s32.totalorder %s28, 0
      %p157 = por %p155, %p156
      %p158 = scmp.ne.s32.totalorder %s150, %s152
      %p159 = scmp.eq.s32.totalorder %s33, 3
      %p160 = por %p158, %p159
      %p161 = scmp.ne.s32.totalorder %s152, %s153
      %p162 = scmp.eq.s32.totalorder %s33, 0
      %p163 = por %p161, %p162
      %p164 = scmp.ne.s32.totalorder %s152, %s153
      %p165 = scmp.eq.s32.totalorder %s34, 3
      %p166 = por %p164, %p165
      %p168 = scmp.ne.s32.totalorder %s153, %s167
      %p169 = scmp.eq.s32.totalorder %s34, 0
      %p170 = por %p168, %p169
      %s171 = ssub.s32 %s35, %s47
      %p172 = scmp.eq.s32.totalorder %s171, 0
      %s174 = sadd.s32 %s173, 1
      %s175 = scalar_select %p172, %s173, %s174
      %p178 = pneg %p172
      %p179 = scmp.eq.s32.totalorder %s28, 3
      %p180 = por %p178, %p179
      %p181 = scmp.ne.s32.totalorder %s173, %s176
      %p182 = scmp.eq.s32.totalorder %s28, 0
      %p183 = por %p181, %p182
      %p184 = scmp.ne.s32.totalorder %s173, %s176
      %p185 = scmp.eq.s32.totalorder %s33, 3
      %p186 = por %p184, %p185
      %p187 = scmp.ne.s32.totalorder %s176, %s177
      %p188 = scmp.eq.s32.totalorder %s33, 0
      %p189 = por %p187, %p188
      %p190 = scmp.ne.s32.totalorder %s176, %s177
      %p191 = scmp.eq.s32.totalorder %s34, 3
      %p192 = por %p190, %p191
      %p194 = scmp.ne.s32.totalorder %s177, %s193
      %p195 = scmp.eq.s32.totalorder %s34, 0
      %p196 = por %p194, %p195
      %p197 = scmp.le.s32.totalorder 1, %s28
      %p198 = scmp.lt.s32.totalorder %s28, 5
      %p199 = pnand %p197, %p198
      %p200 = pneg %p199
      // Predicated region
      $region9: #{tpu_custom_call.1} parent=5 // pred_check
        _
      $region10: #{tpu_custom_call.1} parent=5 // pred_check_branch
        %202 = sbr.rel (%p199) target = $region12
      $region11: #{tpu_custom_call.1} parent=5 // pred_region
        %s203 = ssub.s32 %s28, 1
        // Predicated region
        $region13: #{tpu_custom_call.1} parent=11 // pred_check
          %p204 = pneg %p95
        $region14: #{tpu_custom_call.1} parent=11 // pred_check_branch
          %206 = sbr.rel (%p204) target = $region16
        $region15: #{tpu_custom_call.1} parent=11 // pred_region
          %s208 = ssub.s32 2048, 2048
          %209 = vsyncadd [#allocation8], %s208
          %s210 = sshll.u32 [#allocation7], 4
          %s211 = int_to_ptr.vmem [resolvable:$true] %s210
          %216 = dma.hbm_to_vmem [thread:$0]  %s3, 2048, %s211, [#allocation8], 64, 64, 4
        $region16: #{tpu_custom_call.1} parent=11 // pred_fallthru
          _
        // Predicated region
        $region17: #{tpu_custom_call.1} parent=11 // pred_check
          %p217 = pneg %p142
        $region18: #{tpu_custom_call.1} parent=11 // pred_check_branch
          %219 = sbr.rel (%p217) target = $region20
        $region19: #{tpu_custom_call.1} parent=11 // pred_region
          %s221 = ssub.s32 1024, 1024
          %222 = vsyncadd [#allocation11], %s221
          %s223 = sshll.u32 [#allocation10], 4
          %s224 = int_to_ptr.vmem [resolvable:$true] %s223
          %229 = dma.hbm_to_vmem [thread:$0]  %s5, 1024, %s224, [#allocation11], 64, 64, 4
        $region20: #{tpu_custom_call.1} parent=11 // pred_fallthru
          _
        // Predicated region
        $region21: #{tpu_custom_call.1} parent=11 // pred_check
          %p230 = pneg %p163
        $region22: #{tpu_custom_call.1} parent=11 // pred_check_branch
          %232 = sbr.rel (%p230) target = $region24
        $region23: #{tpu_custom_call.1} parent=11 // pred_region
          _
        $region24: #{tpu_custom_call.1} parent=11 // pred_fallthru
          _
      $region12: #{tpu_custom_call.1} parent=5 // pred_fallthru
        _
      %p233 = scmp.lt.s32.totalorder %s28, 4
      // Predicated region
      $region25: #{tpu_custom_call.1} parent=5 // pred_check
        %p234 = pneg %p233
      $region26: #{tpu_custom_call.1} parent=5 // pred_check_branch
        %236 = sbr.rel (%p234) target = $region28
      $region27: #{tpu_custom_call.1} parent=5 // pred_region
        // Predicated region
        $region29: #{tpu_custom_call.1} parent=27 // pred_check
          %p237 = pneg %p68
        $region30: #{tpu_custom_call.1} parent=27 // pred_check_branch
          %239 = sbr.rel (%p237) target = $region32
        $region31: #{tpu_custom_call.1} parent=27 // pred_region
          %s240 = sand.u32 %s58, 1
          %s241 = sand.u32 %s58, 1
          %s242 = smul.addr %s241, 64
          %s243 = scalar_lea.vmem [#allocation6], %s242
          %s244 = smul.u32 %s35, 2
          %s245 = sadd.s32 %s244, %s36
          %s246 = sld [smem:[#allocation4 + %s245]]
          %s247 = smul.u32 16, %s35
          %s248 = smul.addr %s247, 2
          %s249 = sadd.s32 %s246, %s248
          %s250 = smul.addr %s249, 4
          %s251 = scalar_lea.vmem %s2, %s250
          // Predicated region
          $region33: #{tpu_custom_call.1} parent=31 // pred_check
            _
          $region34: #{tpu_custom_call.1} parent=31 // pred_check_branch
            %253 = sbr.rel (0) target = $region36
          $region35: #{tpu_custom_call.1} parent=31 // pred_region
            // Predicated region
            $region37: #{tpu_custom_call.1} parent=35 // pred_check
              _
            $region38: #{tpu_custom_call.1} parent=35 // pred_check_branch
              %255 = sbr.rel target = $region40
            $region39: #{tpu_custom_call.1} parent=35 // pred_region
              // Predicated region
              $region52: #{tpu_custom_call.1} parent=39 // pred_check
                _
              $region53: #{tpu_custom_call.1} parent=39 // pred_check_branch
                %300 = sbr.rel (0) target = $region55
              $region54: #{tpu_custom_call.1} parent=39 // pred_region
                loop: start=0, step=1, limit=1
                $region56: #{tpu_custom_call.1} parent=54 // loop_pre_header
                  _
                $region57: #{tpu_custom_call.1} parent=54 // loop_header
                  %s302 = sphi 0, %s306
                  %p303 = scmp.ge.s32.totalorder %s302, 1
                  %s307 = sphi %s251, %s251
                  %s308 = sphi %s243, %s243
                $region58: #{tpu_custom_call.1} parent=54 // loop_header_branch
                  %305 = sbr.rel (%p303) target = $region62
                $region59: #{tpu_custom_call.1} parent=54 // loop_body
                  _
                $region60: #{tpu_custom_call.1} parent=54 // loop_footer
                  %s306 = sadd.s32 1, %s302
                $region61: #{tpu_custom_call.1} parent=54 // loop_footer_branch
                  %301 = sbr.rel target = $region57
                $region62: #{tpu_custom_call.1} parent=54 // loop_exit
                  _
                loop: start=0, step=1, limit=1
                $region63: #{tpu_custom_call.1} parent=54 // loop_pre_header
                  _
                $region64: #{tpu_custom_call.1} parent=54 // loop_header
                  %s311 = sphi 0, %s315
                  %p312 = scmp.ge.s32.totalorder %s311, 1
                  %s316 = sphi %s251, %s251
                  %s317 = sphi %s243, %s243
                $region65: #{tpu_custom_call.1} parent=54 // loop_header_branch
                  %314 = sbr.rel (%p312) target = $region69
                $region66: #{tpu_custom_call.1} parent=54 // loop_body
                  %v318 = vld [vmem:[%s316] sm:$0xf]
                  %319 = vst [vmem:[%s317] sm:$0xf] %v318
                  %v320 = vld [vmem:[%s316 + $0x8] sm:$0xf]
                  %321 = vst [vmem:[%s317 + $0x4] sm:$0xf] %v320
                  %v322 = vld [vmem:[%s316 + $0x10] sm:$0xf]
                  %323 = vst [vmem:[%s317 + $0x8] sm:$0xf] %v322
                  %v324 = vld [vmem:[%s316 + $0x18] sm:$0xf]
                  %325 = vst [vmem:[%s317 + $0xc] sm:$0xf] %v324
                  %v326 = vld [vmem:[%s316 + $0x20] sm:$0xf]
                  %327 = vst [vmem:[%s317 + $0x10] sm:$0xf] %v326
                  %v328 = vld [vmem:[%s316 + $0x28] sm:$0xf]
                  %329 = vst [vmem:[%s317 + $0x14] sm:$0xf] %v328
                  %v330 = vld [vmem:[%s316 + $0x30] sm:$0xf]
                  %331 = vst [vmem:[%s317 + $0x18] sm:$0xf] %v330
                  %v332 = vld [vmem:[%s316 + $0x38] sm:$0xf]
                  %333 = vst [vmem:[%s317 + $0x1c] sm:$0xf] %v332
                  %v334 = vld [vmem:[%s316 + $0x40] sm:$0xf]
                  %335 = vst [vmem:[%s317 + $0x20] sm:$0xf] %v334
                  %v336 = vld [vmem:[%s316 + $0x48] sm:$0xf]
                  %337 = vst [vmem:[%s317 + $0x24] sm:$0xf] %v336
                  %v338 = vld [vmem:[%s316 + $0x50] sm:$0xf]
                  %339 = vst [vmem:[%s317 + $0x28] sm:$0xf] %v338
                  %v340 = vld [vmem:[%s316 + $0x58] sm:$0xf]
                  %341 = vst [vmem:[%s317 + $0x2c] sm:$0xf] %v340
                  %v342 = vld [vmem:[%s316 + $0x60] sm:$0xf]
                  %343 = vst [vmem:[%s317 + $0x30] sm:$0xf] %v342
                  %v344 = vld [vmem:[%s316 + $0x68] sm:$0xf]
                  %345 = vst [vmem:[%s317 + $0x34] sm:$0xf] %v344
                  %v346 = vld [vmem:[%s316 + $0x70] sm:$0xf]
                  %347 = vst [vmem:[%s317 + $0x38] sm:$0xf] %v346
                  %v348 = vld [vmem:[%s316 + $0x78] sm:$0xf]
                  %349 = vst [vmem:[%s317 + $0x3c] sm:$0xf] %v348
                $region67: #{tpu_custom_call.1} parent=54 // loop_footer
                  %s315 = sadd.s32 1, %s311
                $region68: #{tpu_custom_call.1} parent=54 // loop_footer_branch
                  %310 = sbr.rel target = $region64
                $region69: #{tpu_custom_call.1} parent=54 // loop_exit
                  _
              $region55: #{tpu_custom_call.1} parent=39 // pred_fallthru
                _
            $region40: #{tpu_custom_call.1} parent=35 // pred_fallthru
              _
            // Predicated region
            $region41: #{tpu_custom_call.1} parent=35 // pred_check
              _
            $region42: #{tpu_custom_call.1} parent=35 // pred_check_branch
              %257 = sbr.rel (0) target = $region44
            $region43: #{tpu_custom_call.1} parent=35 // pred_region
              loop: start=0, step=1, limit=1
              $region45: #{tpu_custom_call.1} parent=43 // loop_pre_header
                _
              $region46: #{tpu_custom_call.1} parent=43 // loop_header
                %s260 = sphi 0, %s264
                %p261 = scmp.ge.s32.totalorder %s260, 1
                %s265 = sphi %s251, %s251
                %s266 = sphi %s243, %s243
              $region47: #{tpu_custom_call.1} parent=43 // loop_header_branch
                %263 = sbr.rel (%p261) target = $region51
              $region48: #{tpu_custom_call.1} parent=43 // loop_body
                %v267 = vld [vmem:[%s265] sm:$0xf]
                %268 = vst [vmem:[%s266] sm:$0xf] %v267
                %v269 = vld [vmem:[%s265 + $0x8] sm:$0xf]
                %270 = vst [vmem:[%s266 + $0x4] sm:$0xf] %v269
                %v271 = vld [vmem:[%s265 + $0x10] sm:$0xf]
                %272 = vst [vmem:[%s266 + $0x8] sm:$0xf] %v271
                %v273 = vld [vmem:[%s265 + $0x18] sm:$0xf]
                %274 = vst [vmem:[%s266 + $0xc] sm:$0xf] %v273
                %v275 = vld [vmem:[%s265 + $0x20] sm:$0xf]
                %276 = vst [vmem:[%s266 + $0x10] sm:$0xf] %v275
                %v277 = vld [vmem:[%s265 + $0x28] sm:$0xf]
                %278 = vst [vmem:[%s266 + $0x14] sm:$0xf] %v277
                %v279 = vld [vmem:[%s265 + $0x30] sm:$0xf]
                %280 = vst [vmem:[%s266 + $0x18] sm:$0xf] %v279
                %v281 = vld [vmem:[%s265 + $0x38] sm:$0xf]
                %282 = vst [vmem:[%s266 + $0x1c] sm:$0xf] %v281
                %v283 = vld [vmem:[%s265 + $0x40] sm:$0xf]
                %284 = vst [vmem:[%s266 + $0x20] sm:$0xf] %v283
                %v285 = vld [vmem:[%s265 + $0x48] sm:$0xf]
                %286 = vst [vmem:[%s266 + $0x24] sm:$0xf] %v285
                %v287 = vld [vmem:[%s265 + $0x50] sm:$0xf]
                %288 = vst [vmem:[%s266 + $0x28] sm:$0xf] %v287
                %v289 = vld [vmem:[%s265 + $0x58] sm:$0xf]
                %290 = vst [vmem:[%s266 + $0x2c] sm:$0xf] %v289
                %v291 = vld [vmem:[%s265 + $0x60] sm:$0xf]
                %292 = vst [vmem:[%s266 + $0x30] sm:$0xf] %v291
                %v293 = vld [vmem:[%s265 + $0x68] sm:$0xf]
                %294 = vst [vmem:[%s266 + $0x34] sm:$0xf] %v293
                %v295 = vld [vmem:[%s265 + $0x70] sm:$0xf]
                %296 = vst [vmem:[%s266 + $0x38] sm:$0xf] %v295
                %v297 = vld [vmem:[%s265 + $0x78] sm:$0xf]
                %298 = vst [vmem:[%s266 + $0x3c] sm:$0xf] %v297
              $region49: #{tpu_custom_call.1} parent=43 // loop_footer
                %s264 = sadd.s32 1, %s260
              $region50: #{tpu_custom_call.1} parent=43 // loop_footer_branch
                %259 = sbr.rel target = $region46
              $region51: #{tpu_custom_call.1} parent=43 // loop_exit
                _
            $region44: #{tpu_custom_call.1} parent=35 // pred_fallthru
              _
          $region36: #{tpu_custom_call.1} parent=31 // pred_fallthru
            _
          %350 = vnop
        $region32: #{tpu_custom_call.1} parent=27 // pred_fallthru
          _
        // Predicated region
        $region70: #{tpu_custom_call.1} parent=27 // pred_check
          %p351 = pneg %p115
        $region71: #{tpu_custom_call.1} parent=27 // pred_check_branch
          %353 = sbr.rel (%p351) target = $region73
        $region72: #{tpu_custom_call.1} parent=27 // pred_region
          %s354 = smul.u32 16, %s35
          %p355 = scmp.lt.s32.totalorder %s354, 31
          %s356 = scalar_select %p355, %s354, 31
          %s357 = smul.addr %s356, 8
          %s358 = scalar_lea.vmem %s4, %s357
          %s359 = smul.u32 16, %s35
        $region73: #{tpu_custom_call.1} parent=27 // pred_fallthru
          _
      $region28: #{tpu_custom_call.1} parent=5 // pred_fallthru
        _
      %p360 = scmp.le.s32.totalorder 1, %s28
      %p361 = scmp.lt.s32.totalorder %s28, 5
      %p362 = pnand %p360, %p361
      %p363 = pneg %p362
      // Predicated region
      $region74: #{tpu_custom_call.1} parent=5 // pred_check
        _
      $region75: #{tpu_custom_call.1} parent=5 // pred_check_branch
        %365 = sbr.rel (%p362) target = $region77
      $region76: #{tpu_custom_call.1} parent=5 // pred_region
        %s366 = ssub.s32 %s28, 1
        %s367 = sand.u32 %s61, 1
        %s368 = sand.u32 %s61, 1
        %s369 = smul.addr %s368, 64
        %s370 = scalar_lea.vmem [#allocation6], %s369
        // Predicated region
        $region78: #{tpu_custom_call.1} parent=76 // pred_check
          %p371 = pneg %p74
        $region79: #{tpu_custom_call.1} parent=76 // pred_check_branch
          %373 = sbr.rel (%p371) target = $region81
        $region80: #{tpu_custom_call.1} parent=76 // pred_region
          _
        $region81: #{tpu_custom_call.1} parent=76 // pred_fallthru
          _
        // Predicated region
        $region82: #{tpu_custom_call.1} parent=76 // pred_check
          %p374 = pneg %p95
        $region83: #{tpu_custom_call.1} parent=76 // pred_check_branch
          %376 = sbr.rel (%p374) target = $region85
        $region84: #{tpu_custom_call.1} parent=76 // pred_region
          %377 = dma.done [#allocation8], 2048
        $region85: #{tpu_custom_call.1} parent=76 // pred_fallthru
          _
        // Predicated region
        $region86: #{tpu_custom_call.1} parent=76 // pred_check
          %p378 = pneg %p142
        $region87: #{tpu_custom_call.1} parent=76 // pred_check_branch
          %380 = sbr.rel (%p378) target = $region89
        $region88: #{tpu_custom_call.1} parent=76 // pred_region
          %381 = dma.done [#allocation11], 1024
        $region89: #{tpu_custom_call.1} parent=76 // pred_fallthru
          _
        %s382 = sand.u32 %s61, 1
        %s383 = sand.u32 %s61, 1
        %s384 = smul.addr %s383, 64
        %s385 = scalar_lea.vmem [#allocation6], %s384
        %p386 = pneg %p74
        %p387 = pneg %p71
        %p388 = pneg %p95
        %p389 = pneg %p92
        %s390 = smul.u32 16, %s37
        %p391 = scmp.lt.s32.totalorder %s390, 31
        %s392 = scalar_select %p391, %s390, 31
        %s393 = smul.addr %s392, 8
        %s394 = scalar_lea.vmem %s4, %s393
        %p395 = pneg %p121
        %p396 = pneg %p118
        %p397 = pneg %p142
        %p398 = pneg %p139
        %p399 = pneg %p163
        %p400 = pneg %p160
        %p401 = pneg %p189
        %p402 = pneg %p186
        %s403 = sand.u32 %s176, 1
        %s404 = scalar_lea.sflag [#allocation9], %s403
        %s405 = sand.u32 %s176, 1
        %s406 = smul.addr %s405, 64
        %s407 = scalar_lea.vmem [#allocation12], %s406
        %s408 = smul.u32 %s37, 2
        %s409 = sadd.s32 %s408, %s38
        %s410 = sld [smem:[#allocation4 + %s409]]
        %s411 = smul.u32 16, %s37
        %s412 = smul.u32 16, %s37
        %p413 = scmp.lt.s32.totalorder %s412, 31
        %s414 = scalar_select %p413, %s412, 31
        %s415 = smul.addr %s414, 8
        %s416 = scalar_lea.vmem %s4, %s415
        %s417 = smul.u32 16, %s37
        %s418 = smul.u32 16, %s37
        %p420 = scmp.eq.s32.totalorder %s38, 0
        // Predicated region
        $region90: #{tpu_custom_call.1} parent=76 // pred_check
          %p421 = pneg %p420
        $region91: #{tpu_custom_call.1} parent=76 // pred_check_branch
          %423 = sbr.rel (%p421) target = $region93
        $region92: #{tpu_custom_call.1} parent=76 // pred_region
          %424 = vst [vmem:[#allocation2] sm:$0xff] 0.0
          %425 = vst [vmem:[#allocation2 + $0x8] sm:$0xff] 0.0
          %426 = vst [vmem:[#allocation2 + $0x10] sm:$0xff] 0.0
          %427 = vst [vmem:[#allocation2 + $0x18] sm:$0xff] 0.0
          %428 = vst [vmem:[#allocation2 + $0x20] sm:$0xff] 0.0
          %429 = vst [vmem:[#allocation2 + $0x28] sm:$0xff] 0.0
          %430 = vst [vmem:[#allocation2 + $0x30] sm:$0xff] 0.0
          %431 = vst [vmem:[#allocation2 + $0x38] sm:$0xff] 0.0
          %432 = vst [vmem:[#allocation2 + $0x40] sm:$0xff] 0.0
          %433 = vst [vmem:[#allocation2 + $0x48] sm:$0xff] 0.0
          %434 = vst [vmem:[#allocation2 + $0x50] sm:$0xff] 0.0
          %435 = vst [vmem:[#allocation2 + $0x58] sm:$0xff] 0.0
          %436 = vst [vmem:[#allocation2 + $0x60] sm:$0xff] 0.0
          %437 = vst [vmem:[#allocation2 + $0x68] sm:$0xff] 0.0
          %438 = vst [vmem:[#allocation2 + $0x70] sm:$0xff] 0.0
          %439 = vst [vmem:[#allocation2 + $0x78] sm:$0xff] 0.0
        $region93: #{tpu_custom_call.1} parent=76 // pred_fallthru
          _
        %s440 = sld [smem:[#allocation5 + %s37]]
        %p441 = scmp.lt.s32.totalorder %s38, %s440
        // Predicated region
        $region94: #{tpu_custom_call.1} parent=76 // pred_check
          %p442 = pneg %p441
        $region95: #{tpu_custom_call.1} parent=76 // pred_check_branch
          %444 = sbr.rel (%p442) target = $region97
        $region96: #{tpu_custom_call.1} parent=76 // pred_region
          %s445 = smul.u32 %s37, 2
          %s446 = sadd.s32 %s445, %s38
          %s447 = sld [smem:[#allocation4 + %s446]]
          %s448 = smul.u32 %s447, 128
          %s449 = sshra.s32 %s448, 3
          %s450 = sand.u32 %s448, 7
          %s451 = smul.addr %s449, 4
          %s452 = scalar_lea.vmem [#allocation7], %s451
          %v453 = vld [vmem:[%s452] sm:$0xf]
          %v454 = vld [vmem:[%s452 + $0x4] sm:$0xf]
          %v455 = vld [vmem:[%s452 + $0x8] sm:$0xf]
          %v456 = vld [vmem:[%s452 + $0xc] sm:$0xf]
          %v457 = vld [vmem:[%s452 + $0x10] sm:$0xf]
          %v458 = vld [vmem:[%s452 + $0x14] sm:$0xf]
          %v459 = vld [vmem:[%s452 + $0x18] sm:$0xf]
          %v460 = vld [vmem:[%s452 + $0x1c] sm:$0xf]
          %v461 = vld [vmem:[%s452 + $0x20] sm:$0xf]
          %v462 = vld [vmem:[%s452 + $0x24] sm:$0xf]
          %v463 = vld [vmem:[%s452 + $0x28] sm:$0xf]
          %v464 = vld [vmem:[%s452 + $0x2c] sm:$0xf]
          %v465 = vld [vmem:[%s452 + $0x30] sm:$0xf]
          %v466 = vld [vmem:[%s452 + $0x34] sm:$0xf]
          %v467 = vld [vmem:[%s452 + $0x38] sm:$0xf]
          %v468 = vld [vmem:[%s452 + $0x3c] sm:$0xf]
          %v469 = vld [vmem:[#allocation2] sm:$0xff]
          %v470 = vld [vmem:[#allocation2 + $0x8] sm:$0xff]
          %v471 = vld [vmem:[#allocation2 + $0x10] sm:$0xff]
          %v472 = vld [vmem:[#allocation2 + $0x18] sm:$0xff]
          %v473 = vld [vmem:[#allocation2 + $0x20] sm:$0xff]
          %v474 = vld [vmem:[#allocation2 + $0x28] sm:$0xff]
          %v475 = vld [vmem:[#allocation2 + $0x30] sm:$0xff]
          %v476 = vld [vmem:[#allocation2 + $0x38] sm:$0xff]
          %v477 = vld [vmem:[#allocation2 + $0x40] sm:$0xff]
          %v478 = vld [vmem:[#allocation2 + $0x48] sm:$0xff]
          %v479 = vld [vmem:[#allocation2 + $0x50] sm:$0xff]
          %v480 = vld [vmem:[#allocation2 + $0x58] sm:$0xff]
          %v481 = vld [vmem:[#allocation2 + $0x60] sm:$0xff]
          %v482 = vld [vmem:[#allocation2 + $0x68] sm:$0xff]
          %v483 = vld [vmem:[#allocation2 + $0x70] sm:$0xff]
          %v484 = vld [vmem:[#allocation2 + $0x78] sm:$0xff]
          %v485 = vld [vmem:[%s370] sm:$0xf]
          %v486 = vld [vmem:[%s370 + $0x4] sm:$0xf]
          %v487 = vld [vmem:[%s370 + $0x8] sm:$0xf]
          %v488 = vld [vmem:[%s370 + $0xc] sm:$0xf]
          %v489 = vld [vmem:[%s370 + $0x10] sm:$0xf]
          %v490 = vld [vmem:[%s370 + $0x14] sm:$0xf]
          %v491 = vld [vmem:[%s370 + $0x18] sm:$0xf]
          %v492 = vld [vmem:[%s370 + $0x1c] sm:$0xf]
          %v493 = vld [vmem:[%s370 + $0x20] sm:$0xf]
          %v494 = vld [vmem:[%s370 + $0x24] sm:$0xf]
          %v495 = vld [vmem:[%s370 + $0x28] sm:$0xf]
          %v496 = vld [vmem:[%s370 + $0x2c] sm:$0xf]
          %v497 = vld [vmem:[%s370 + $0x30] sm:$0xf]
          %v498 = vld [vmem:[%s370 + $0x34] sm:$0xf]
          %v499 = vld [vmem:[%s370 + $0x38] sm:$0xf]
          %v500 = vld [vmem:[%s370 + $0x3c] sm:$0xf]
          %v517 = vunpack.c.l.b16 %v485
          %v518 = vunpack.c.l.b16 %v486
          %v519 = vunpack.c.l.b16 %v487
          %v520 = vunpack.c.l.b16 %v488
          %v521 = vunpack.c.l.b16 %v489
          %v522 = vunpack.c.l.b16 %v490
          %v523 = vunpack.c.l.b16 %v491
          %v524 = vunpack.c.l.b16 %v492
          %v525 = vunpack.c.l.b16 %v493
          %v526 = vunpack.c.l.b16 %v494
          %v527 = vunpack.c.l.b16 %v495
          %v528 = vunpack.c.l.b16 %v496
          %v529 = vunpack.c.l.b16 %v497
          %v530 = vunpack.c.l.b16 %v498
          %v531 = vunpack.c.l.b16 %v499
          %v532 = vunpack.c.l.b16 %v500
          %v533 = vpack.c.b16 %v518, %v517
          %v534 = vpack.c.b16 %v520, %v519
          %v535 = vpack.c.b16 %v522, %v521
          %v536 = vpack.c.b16 %v524, %v523
          %v537 = vpack.c.b16 %v526, %v525
          %v538 = vpack.c.b16 %v528, %v527
          %v539 = vpack.c.b16 %v530, %v529
          %v540 = vpack.c.b16 %v532, %v531
          %v565 = vunpack.c.l.b16 %v453
          %v566 = vunpack.c.l.b16 %v454
          %v567 = vunpack.c.l.b16 %v455
          %v568 = vunpack.c.l.b16 %v456
          %v569 = vunpack.c.l.b16 %v457
          %v570 = vunpack.c.l.b16 %v458
          %v571 = vunpack.c.l.b16 %v459
          %v572 = vunpack.c.l.b16 %v460
          %v573 = vunpack.c.l.b16 %v461
          %v574 = vunpack.c.l.b16 %v462
          %v575 = vunpack.c.l.b16 %v463
          %v576 = vunpack.c.l.b16 %v464
          %v577 = vunpack.c.l.b16 %v465
          %v578 = vunpack.c.l.b16 %v466
          %v579 = vunpack.c.l.b16 %v467
          %v580 = vunpack.c.l.b16 %v468
          %v581 = vpack.c.b16 %v566, %v565
          %v582 = vpack.c.b16 %v568, %v567
          %v583 = vpack.c.b16 %v570, %v569
          %v584 = vpack.c.b16 %v572, %v571
          %v585 = vpack.c.b16 %v574, %v573
          %v586 = vpack.c.b16 %v576, %v575
          %v587 = vpack.c.b16 %v578, %v577
          %v588 = vpack.c.b16 %v580, %v579
          %597 = vmatprep.subr.bf16.mxu0 0
          %598 = vmatpush1.bf16.msra.mxu0 %v581
          %599 = vmatprep.subr.bf16.mxu0 0
          %600 = vmatpush1.bf16.msra.mxu0 %v582
          %601 = vmatprep.subr.bf16.mxu0 0
          %602 = vmatpush1.bf16.msra.mxu0 %v583
          %603 = vmatprep.subr.bf16.mxu0 0
          %604 = vmatpush1.bf16.msra.mxu0 %v584
          %605 = vmatprep.subr.bf16.mxu0 0
          %606 = vmatpush1.bf16.msra.mxu0 %v585
          %607 = vmatprep.subr.bf16.mxu0 0
          %608 = vmatpush1.bf16.msra.mxu0 %v586
          %609 = vmatprep.subr.bf16.mxu0 0
          %610 = vmatpush1.bf16.msra.mxu0 %v587
          %611 = vmatprep.subr.bf16.mxu0 0
          %612 = vmatpush1.bf16.msra.mxu0 %v588
          %613 = vmatprep.subr.bf16.mxu0 0
          %614 = vmatpush1.bf16.msra.mxu0 0
          %615 = vmatprep.subr.bf16.mxu0 0
          %616 = vmatpush1.bf16.msra.mxu0 0
          %617 = vmatprep.subr.bf16.mxu0 0
          %618 = vmatpush1.bf16.msra.mxu0 0
          %619 = vmatprep.subr.bf16.mxu0 0
          %620 = vmatpush1.bf16.msra.mxu0 0
          %621 = vmatprep.subr.bf16.mxu0 0
          %622 = vmatpush1.bf16.msra.mxu0 0
          %623 = vmatprep.subr.bf16.mxu0 0
          %624 = vmatpush1.bf16.msra.mxu0 0
          %625 = vmatprep.subr.bf16.mxu0 0
          %626 = vmatpush1.bf16.msra.mxu0 0
          %627 = vmatprep.subr.bf16.mxu0 0
          %628 = vmatpush1.bf16.msra.mxu0 0
          %629 = vmatprep.mubr.bf16.mxu0 0
          %630 = vmatmul.mubr.bf16.gmra.mrb[0].mxu0 %v533
          %v631 = vpop.f32.mrb[0].mxu0
          %v632 = vadd.f32 0.0, %v631
          %v633 = vpop.f32.mrb[0].mxu0
          %v634 = vpop.f32.mrb[0].mxu0
          %v635 = vadd.f32 0.0, %v634
          %v636 = vpop.f32.mrb[0].mxu0
          %637 = vmatprep.mubr.bf16.mxu0 0
          %638 = vmatmul.mubr.bf16.gmra.mrb[0].mxu0 %v534
          %v639 = vpop.f32.mrb[0].mxu0
          %v640 = vadd.f32 0.0, %v639
          %v641 = vpop.f32.mrb[0].mxu0
          %v642 = vpop.f32.mrb[0].mxu0
          %v643 = vadd.f32 0.0, %v642
          %v644 = vpop.f32.mrb[0].mxu0
          %645 = vmatprep.mubr.bf16.mxu0 0
          %646 = vmatmul.mubr.bf16.gmra.mrb[0].mxu0 %v535
          %v647 = vpop.f32.mrb[0].mxu0
          %v648 = vadd.f32 0.0, %v647
          %v649 = vpop.f32.mrb[0].mxu0
          %v650 = vpop.f32.mrb[0].mxu0
          %v651 = vadd.f32 0.0, %v650
          %v652 = vpop.f32.mrb[0].mxu0
          %653 = vmatprep.mubr.bf16.mxu0 0
          %654 = vmatmul.mubr.bf16.gmra.mrb[0].mxu0 %v536
          %v655 = vpop.f32.mrb[0].mxu0
          %v656 = vadd.f32 0.0, %v655
          %v657 = vpop.f32.mrb[0].mxu0
          %v658 = vpop.f32.mrb[0].mxu0
          %v659 = vadd.f32 0.0, %v658
          %v660 = vpop.f32.mrb[0].mxu0
          %661 = vmatprep.mubr.bf16.mxu0 0
          %662 = vmatmul.mubr.bf16.gmra.mrb[0].mxu0 %v537
          %v663 = vpop.f32.mrb[0].mxu0
          %v664 = vadd.f32 0.0, %v663
          %v665 = vpop.f32.mrb[0].mxu0
          %v666 = vpop.f32.mrb[0].mxu0
          %v667 = vadd.f32 0.0, %v666
          %v668 = vpop.f32.mrb[0].mxu0
          %669 = vmatprep.mubr.bf16.mxu0 0
          %670 = vmatmul.mubr.bf16.gmra.mrb[0].mxu0 %v538
          %v671 = vpop.f32.mrb[0].mxu0
          %v672 = vadd.f32 0.0, %v671
          %v673 = vpop.f32.mrb[0].mxu0
          %v674 = vpop.f32.mrb[0].mxu0
          %v675 = vadd.f32 0.0, %v674
          %v676 = vpop.f32.mrb[0].mxu0
          %677 = vmatprep.mubr.bf16.mxu0 0
          %678 = vmatmul.mubr.bf16.gmra.mrb[0].mxu0 %v539
          %v679 = vpop.f32.mrb[0].mxu0
          %v680 = vadd.f32 0.0, %v679
          %v681 = vpop.f32.mrb[0].mxu0
          %v682 = vpop.f32.mrb[0].mxu0
          %v683 = vadd.f32 0.0, %v682
          %v684 = vpop.f32.mrb[0].mxu0
          %685 = vmatprep.mubr.bf16.mxu0 0
          %686 = vmatmul.mubr.bf16.gmra.mrb[0].mxu0 %v540
          %v687 = vpop.f32.mrb[0].mxu0
          %v688 = vadd.f32 0.0, %v687
          %v689 = vpop.f32.mrb[0].mxu0
          %v690 = vpop.f32.mrb[0].mxu0
          %v691 = vadd.f32 0.0, %v690
          %v692 = vpop.f32.mrb[0].mxu0
          %693 = vdwg.mxu0
          %v694 = vadd.f32 %v469, %v632
          %v695 = vadd.f32 %v470, %v635
          %v696 = vadd.f32 %v471, %v640
          %v697 = vadd.f32 %v472, %v643
          %v698 = vadd.f32 %v473, %v648
          %v699 = vadd.f32 %v474, %v651
          %v700 = vadd.f32 %v475, %v656
          %v701 = vadd.f32 %v476, %v659
          %v702 = vadd.f32 %v477, %v664
          %v703 = vadd.f32 %v478, %v667
          %v704 = vadd.f32 %v479, %v672
          %v705 = vadd.f32 %v480, %v675
          %v706 = vadd.f32 %v481, %v680
          %v707 = vadd.f32 %v482, %v683
          %v708 = vadd.f32 %v483, %v688
          %v709 = vadd.f32 %v484, %v691
          %710 = vst [vmem:[#allocation2] sm:$0xff] %v694
          %711 = vst [vmem:[#allocation2 + $0x8] sm:$0xff] %v695
          %712 = vst [vmem:[#allocation2 + $0x10] sm:$0xff] %v696
          %713 = vst [vmem:[#allocation2 + $0x18] sm:$0xff] %v697
          %714 = vst [vmem:[#allocation2 + $0x20] sm:$0xff] %v698
          %715 = vst [vmem:[#allocation2 + $0x28] sm:$0xff] %v699
          %716 = vst [vmem:[#allocation2 + $0x30] sm:$0xff] %v700
          %717 = vst [vmem:[#allocation2 + $0x38] sm:$0xff] %v701
          %718 = vst [vmem:[#allocation2 + $0x40] sm:$0xff] %v702
          %719 = vst [vmem:[#allocation2 + $0x48] sm:$0xff] %v703
          %720 = vst [vmem:[#allocation2 + $0x50] sm:$0xff] %v704
          %721 = vst [vmem:[#allocation2 + $0x58] sm:$0xff] %v705
          %722 = vst [vmem:[#allocation2 + $0x60] sm:$0xff] %v706
          %723 = vst [vmem:[#allocation2 + $0x68] sm:$0xff] %v707
          %724 = vst [vmem:[#allocation2 + $0x70] sm:$0xff] %v708
          %725 = vst [vmem:[#allocation2 + $0x78] sm:$0xff] %v709
        $region97: #{tpu_custom_call.1} parent=76 // pred_fallthru
          _
        %p726 = scmp.eq.s32.totalorder %s38, 1
        // Predicated region
        $region98: #{tpu_custom_call.1} parent=76 // pred_check
          %p727 = pneg %p726
        $region99: #{tpu_custom_call.1} parent=76 // pred_check_branch
          %729 = sbr.rel (%p727) target = $region101
        $region100: #{tpu_custom_call.1} parent=76 // pred_region
          %v730 = vld [vmem:[#allocation2] sm:$0xff]
          %v731 = vld [vmem:[#allocation2 + $0x8] sm:$0xff]
          %v732 = vld [vmem:[#allocation2 + $0x10] sm:$0xff]
          %v733 = vld [vmem:[#allocation2 + $0x18] sm:$0xff]
          %v734 = vld [vmem:[#allocation2 + $0x20] sm:$0xff]
          %v735 = vld [vmem:[#allocation2 + $0x28] sm:$0xff]
          %v736 = vld [vmem:[#allocation2 + $0x30] sm:$0xff]
          %v737 = vld [vmem:[#allocation2 + $0x38] sm:$0xff]
          %v738 = vld [vmem:[#allocation2 + $0x40] sm:$0xff]
          %v739 = vld [vmem:[#allocation2 + $0x48] sm:$0xff]
          %v740 = vld [vmem:[#allocation2 + $0x50] sm:$0xff]
          %v741 = vld [vmem:[#allocation2 + $0x58] sm:$0xff]
          %v742 = vld [vmem:[#allocation2 + $0x60] sm:$0xff]
          %v743 = vld [vmem:[#allocation2 + $0x68] sm:$0xff]
          %v744 = vld [vmem:[#allocation2 + $0x70] sm:$0xff]
          %v745 = vld [vmem:[#allocation2 + $0x78] sm:$0xff]
          %v746 = vld [vmem:[%s416] sm:$0xff]
          %v747 = vld [vmem:[%s416 + $0x8] sm:$0xff]
          %v748 = vld [vmem:[%s416 + $0x10] sm:$0xff]
          %v749 = vld [vmem:[%s416 + $0x18] sm:$0xff]
          %v750 = vld [vmem:[%s416 + $0x20] sm:$0xff]
          %v751 = vld [vmem:[%s416 + $0x28] sm:$0xff]
          %v752 = vld [vmem:[%s416 + $0x30] sm:$0xff]
          %v753 = vld [vmem:[%s416 + $0x38] sm:$0xff]
          %v754 = vld [vmem:[%s416 + $0x40] sm:$0xff]
          %v755 = vld [vmem:[%s416 + $0x48] sm:$0xff]
          %v756 = vld [vmem:[%s416 + $0x50] sm:$0xff]
          %v757 = vld [vmem:[%s416 + $0x58] sm:$0xff]
          %v758 = vld [vmem:[%s416 + $0x60] sm:$0xff]
          %v759 = vld [vmem:[%s416 + $0x68] sm:$0xff]
          %v760 = vld [vmem:[%s416 + $0x70] sm:$0xff]
          %v761 = vld [vmem:[%s416 + $0x78] sm:$0xff]
          %763 = vset.pattern.permute.xlu0 0
          %764 = vperm.xlu0 %763, %v746
          %v765 = vpop.permute.xlu0 %764
          %768 = vset.pattern.permute.xlu0 0
          %769 = vperm.xlu0 %768, %v747
          %v770 = vpop.permute.xlu0 %769
          %773 = vset.pattern.permute.xlu0 0
          %774 = vperm.xlu0 %773, %v748
          %v775 = vpop.permute.xlu0 %774
          %778 = vset.pattern.permute.xlu0 0
          %779 = vperm.xlu0 %778, %v749
          %v780 = vpop.permute.xlu0 %779
          %783 = vset.pattern.permute.xlu0 0
          %784 = vperm.xlu0 %783, %v750
          %v785 = vpop.permute.xlu0 %784
          %788 = vset.pattern.permute.xlu0 0
          %789 = vperm.xlu0 %788, %v751
          %v790 = vpop.permute.xlu0 %789
          %793 = vset.pattern.permute.xlu0 0
          %794 = vperm.xlu0 %793, %v752
          %v795 = vpop.permute.xlu0 %794
          %798 = vset.pattern.permute.xlu0 0
          %799 = vperm.xlu0 %798, %v753
          %v800 = vpop.permute.xlu0 %799
          %803 = vset.pattern.permute.xlu0 0
          %804 = vperm.xlu0 %803, %v754
          %v805 = vpop.permute.xlu0 %804
          %808 = vset.pattern.permute.xlu0 0
          %809 = vperm.xlu0 %808, %v755
          %v810 = vpop.permute.xlu0 %809
          %813 = vset.pattern.permute.xlu0 0
          %814 = vperm.xlu0 %813, %v756
          %v815 = vpop.permute.xlu0 %814
          %818 = vset.pattern.permute.xlu0 0
          %819 = vperm.xlu0 %818, %v757
          %v820 = vpop.permute.xlu0 %819
          %823 = vset.pattern.permute.xlu0 0
          %824 = vperm.xlu0 %823, %v758
          %v825 = vpop.permute.xlu0 %824
          %828 = vset.pattern.permute.xlu0 0
          %829 = vperm.xlu0 %828, %v759
          %v830 = vpop.permute.xlu0 %829
          %833 = vset.pattern.permute.xlu0 0
          %834 = vperm.xlu0 %833, %v760
          %v835 = vpop.permute.xlu0 %834
          %838 = vset.pattern.permute.xlu0 0
          %839 = vperm.xlu0 %838, %v761
          %v840 = vpop.permute.xlu0 %839
          %v842 = vmul.f32 %v730, %v765
          %v843 = vmul.f32 %v731, %v770
          %v844 = vmul.f32 %v732, %v775
          %v845 = vmul.f32 %v733, %v780
          %v846 = vmul.f32 %v734, %v785
          %v847 = vmul.f32 %v735, %v790
          %v848 = vmul.f32 %v736, %v795
          %v849 = vmul.f32 %v737, %v800
          %v850 = vmul.f32 %v738, %v805
          %v851 = vmul.f32 %v739, %v810
          %v852 = vmul.f32 %v740, %v815
          %v853 = vmul.f32 %v741, %v820
          %v854 = vmul.f32 %v742, %v825
          %v855 = vmul.f32 %v743, %v830
          %v856 = vmul.f32 %v744, %v835
          %v857 = vmul.f32 %v745, %v840
          %v858 = vpack.c.bf16 %v843, %v842
          %v859 = vpack.c.bf16 %v845, %v844
          %v860 = vpack.c.bf16 %v847, %v846
          %v861 = vpack.c.bf16 %v849, %v848
          %v862 = vpack.c.bf16 %v851, %v850
          %v863 = vpack.c.bf16 %v853, %v852
          %v864 = vpack.c.bf16 %v855, %v854
          %v865 = vpack.c.bf16 %v857, %v856
          %v866 = vld [vmem:[#allocation10] sm:$0xf]
          %v867 = vld [vmem:[#allocation10 + $0x4] sm:$0xf]
          %v868 = vld [vmem:[#allocation10 + $0x8] sm:$0xf]
          %v869 = vld [vmem:[#allocation10 + $0xc] sm:$0xf]
          %v870 = vld [vmem:[#allocation10 + $0x10] sm:$0xf]
          %v871 = vld [vmem:[#allocation10 + $0x14] sm:$0xf]
          %v872 = vld [vmem:[#allocation10 + $0x18] sm:$0xf]
          %v873 = vld [vmem:[#allocation10 + $0x1c] sm:$0xf]
          %v874 = vld [vmem:[#allocation10 + $0x20] sm:$0xf]
          %v875 = vld [vmem:[#allocation10 + $0x24] sm:$0xf]
          %v876 = vld [vmem:[#allocation10 + $0x28] sm:$0xf]
          %v877 = vld [vmem:[#allocation10 + $0x2c] sm:$0xf]
          %v878 = vld [vmem:[#allocation10 + $0x30] sm:$0xf]
          %v879 = vld [vmem:[#allocation10 + $0x34] sm:$0xf]
          %v880 = vld [vmem:[#allocation10 + $0x38] sm:$0xf]
          %v881 = vld [vmem:[#allocation10 + $0x3c] sm:$0xf]
          %v882 = vld [vmem:[%s6] sm:$0x1]
          %v884 = vlaneseq
          %v885 = vshrl.u32 %v884, 7
          %v886 = vsub.s32 0, %v885
          %v887 = vrot.slane %v882, %v886
          %v905 = vunpack.c.l.b16 %v866
          %v906 = vunpack.c.l.b16 %v867
          %v907 = vunpack.c.l.b16 %v868
          %v908 = vunpack.c.l.b16 %v869
          %v909 = vunpack.c.l.b16 %v870
          %v910 = vunpack.c.l.b16 %v871
          %v911 = vunpack.c.l.b16 %v872
          %v912 = vunpack.c.l.b16 %v873
          %v913 = vunpack.c.l.b16 %v874
          %v914 = vunpack.c.l.b16 %v875
          %v915 = vunpack.c.l.b16 %v876
          %v916 = vunpack.c.l.b16 %v877
          %v917 = vunpack.c.l.b16 %v878
          %v918 = vunpack.c.l.b16 %v879
          %v919 = vunpack.c.l.b16 %v880
          %v920 = vunpack.c.l.b16 %v881
          %v921 = vpack.c.b16 %v906, %v905
          %v922 = vpack.c.b16 %v908, %v907
          %v923 = vpack.c.b16 %v910, %v909
          %v924 = vpack.c.b16 %v912, %v911
          %v925 = vpack.c.b16 %v914, %v913
          %v926 = vpack.c.b16 %v916, %v915
          %v927 = vpack.c.b16 %v918, %v917
          %v928 = vpack.c.b16 %v920, %v919
          %937 = vmatprep.subr.bf16.mxu0 0
          %938 = vmatpush1.bf16.msra.mxu0 %v921
          %939 = vmatprep.subr.bf16.mxu0 0
          %940 = vmatpush1.bf16.msra.mxu0 %v922
          %941 = vmatprep.subr.bf16.mxu0 0
          %942 = vmatpush1.bf16.msra.mxu0 %v923
          %943 = vmatprep.subr.bf16.mxu0 0
          %944 = vmatpush1.bf16.msra.mxu0 %v924
          %945 = vmatprep.subr.bf16.mxu0 0
          %946 = vmatpush1.bf16.msra.mxu0 %v925
          %947 = vmatprep.subr.bf16.mxu0 0
          %948 = vmatpush1.bf16.msra.mxu0 %v926
          %949 = vmatprep.subr.bf16.mxu0 0
          %950 = vmatpush1.bf16.msra.mxu0 %v927
          %951 = vmatprep.subr.bf16.mxu0 0
          %952 = vmatpush1.bf16.msra.mxu0 %v928
          %953 = vmatprep.subr.bf16.mxu0 0
          %954 = vmatpush1.bf16.msra.mxu0 0
          %955 = vmatprep.subr.bf16.mxu0 0
          %956 = vmatpush1.bf16.msra.mxu0 0
          %957 = vmatprep.subr.bf16.mxu0 0
          %958 = vmatpush1.bf16.msra.mxu0 0
          %959 = vmatprep.subr.bf16.mxu0 0
          %960 = vmatpush1.bf16.msra.mxu0 0
          %961 = vmatprep.subr.bf16.mxu0 0
          %962 = vmatpush1.bf16.msra.mxu0 0
          %963 = vmatprep.subr.bf16.mxu0 0
          %964 = vmatpush1.bf16.msra.mxu0 0
          %965 = vmatprep.subr.bf16.mxu0 0
          %966 = vmatpush1.bf16.msra.mxu0 0
          %967 = vmatprep.subr.bf16.mxu0 0
          %968 = vmatpush1.bf16.msra.mxu0 0
          %969 = vmatprep.mubr.bf16.mxu0 0
          %970 = vmatmul.mubr.bf16.gmra.mrb[0].mxu0 %v858
          %v971 = vpop.f32.mrb[0].mxu0
          %v972 = vadd.f32 %v887, %v971
          %v973 = vpop.f32.mrb[0].mxu0
          %v974 = vpop.f32.mrb[0].mxu0
          %v975 = vadd.f32 %v887, %v974
          %v976 = vpop.f32.mrb[0].mxu0
          %977 = vmatprep.mubr.bf16.mxu0 0
          %978 = vmatmul.mubr.bf16.gmra.mrb[0].mxu0 %v859
          %v979 = vpop.f32.mrb[0].mxu0
          %v980 = vadd.f32 %v887, %v979
          %v981 = vpop.f32.mrb[0].mxu0
          %v982 = vpop.f32.mrb[0].mxu0
          %v983 = vadd.f32 %v887, %v982
          %v984 = vpop.f32.mrb[0].mxu0
          %985 = vmatprep.mubr.bf16.mxu0 0
          %986 = vmatmul.mubr.bf16.gmra.mrb[0].mxu0 %v860
          %v987 = vpop.f32.mrb[0].mxu0
          %v988 = vadd.f32 %v887, %v987
          %v989 = vpop.f32.mrb[0].mxu0
          %v990 = vpop.f32.mrb[0].mxu0
          %v991 = vadd.f32 %v887, %v990
          %v992 = vpop.f32.mrb[0].mxu0
          %993 = vmatprep.mubr.bf16.mxu0 0
          %994 = vmatmul.mubr.bf16.gmra.mrb[0].mxu0 %v861
          %v995 = vpop.f32.mrb[0].mxu0
          %v996 = vadd.f32 %v887, %v995
          %v997 = vpop.f32.mrb[0].mxu0
          %v998 = vpop.f32.mrb[0].mxu0
          %v999 = vadd.f32 %v887, %v998
          %v1000 = vpop.f32.mrb[0].mxu0
          %1001 = vmatprep.mubr.bf16.mxu0 0
          %1002 = vmatmul.mubr.bf16.gmra.mrb[0].mxu0 %v862
          %v1003 = vpop.f32.mrb[0].mxu0
          %v1004 = vadd.f32 %v887, %v1003
          %v1005 = vpop.f32.mrb[0].mxu0
          %v1006 = vpop.f32.mrb[0].mxu0
          %v1007 = vadd.f32 %v887, %v1006
          %v1008 = vpop.f32.mrb[0].mxu0
          %1009 = vmatprep.mubr.bf16.mxu0 0
          %1010 = vmatmul.mubr.bf16.gmra.mrb[0].mxu0 %v863
          %v1011 = vpop.f32.mrb[0].mxu0
          %v1012 = vadd.f32 %v887, %v1011
          %v1013 = vpop.f32.mrb[0].mxu0
          %v1014 = vpop.f32.mrb[0].mxu0
          %v1015 = vadd.f32 %v887, %v1014
          %v1016 = vpop.f32.mrb[0].mxu0
          %1017 = vmatprep.mubr.bf16.mxu0 0
          %1018 = vmatmul.mubr.bf16.gmra.mrb[0].mxu0 %v864
          %v1019 = vpop.f32.mrb[0].mxu0
          %v1020 = vadd.f32 %v887, %v1019
          %v1021 = vpop.f32.mrb[0].mxu0
          %v1022 = vpop.f32.mrb[0].mxu0
          %v1023 = vadd.f32 %v887, %v1022
          %v1024 = vpop.f32.mrb[0].mxu0
          %1025 = vmatprep.mubr.bf16.mxu0 0
          %1026 = vmatmul.mubr.bf16.gmra.mrb[0].mxu0 %v865
          %v1027 = vpop.f32.mrb[0].mxu0
          %v1028 = vadd.f32 %v887, %v1027
          %v1029 = vpop.f32.mrb[0].mxu0
          %v1030 = vpop.f32.mrb[0].mxu0
          %v1031 = vadd.f32 %v887, %v1030
          %v1032 = vpop.f32.mrb[0].mxu0
          %1033 = vdwg.mxu0
          %v1034 = vmax.f32 %v972, 0.0
          %v1035 = vmax.f32 %v975, 0.0
          %v1036 = vmax.f32 %v980, 0.0
          %v1037 = vmax.f32 %v983, 0.0
          %v1038 = vmax.f32 %v988, 0.0
          %v1039 = vmax.f32 %v991, 0.0
          %v1040 = vmax.f32 %v996, 0.0
          %v1041 = vmax.f32 %v999, 0.0
          %v1042 = vmax.f32 %v1004, 0.0
          %v1043 = vmax.f32 %v1007, 0.0
          %v1044 = vmax.f32 %v1012, 0.0
          %v1045 = vmax.f32 %v1015, 0.0
          %v1046 = vmax.f32 %v1020, 0.0
          %v1047 = vmax.f32 %v1023, 0.0
          %v1048 = vmax.f32 %v1028, 0.0
          %v1049 = vmax.f32 %v1031, 0.0
          %v1050 = vmul.f32 %v1034, %v765
          %v1051 = vmul.f32 %v1035, %v770
          %v1052 = vmul.f32 %v1036, %v775
          %v1053 = vmul.f32 %v1037, %v780
          %v1054 = vmul.f32 %v1038, %v785
          %v1055 = vmul.f32 %v1039, %v790
          %v1056 = vmul.f32 %v1040, %v795
          %v1057 = vmul.f32 %v1041, %v800
          %v1058 = vmul.f32 %v1042, %v805
          %v1059 = vmul.f32 %v1043, %v810
          %v1060 = vmul.f32 %v1044, %v815
          %v1061 = vmul.f32 %v1045, %v820
          %v1062 = vmul.f32 %v1046, %v825
          %v1063 = vmul.f32 %v1047, %v830
          %v1064 = vmul.f32 %v1048, %v835
          %v1065 = vmul.f32 %v1049, %v840
          %v1066 = vpack.c.bf16 %v1051, %v1050
          %v1067 = vpack.c.bf16 %v1053, %v1052
          %v1068 = vpack.c.bf16 %v1055, %v1054
          %v1069 = vpack.c.bf16 %v1057, %v1056
          %v1070 = vpack.c.bf16 %v1059, %v1058
          %v1071 = vpack.c.bf16 %v1061, %v1060
          %v1072 = vpack.c.bf16 %v1063, %v1062
          %v1073 = vpack.c.bf16 %v1065, %v1064
          %v1082 = vunpack.c.l.b16 %v1066
          %v1083 = vunpack.c.h.b16 %v1066
          %v1084 = vunpack.c.l.b16 %v1067
          %v1085 = vunpack.c.h.b16 %v1067
          %v1086 = vunpack.c.l.b16 %v1068
          %v1087 = vunpack.c.h.b16 %v1068
          %v1088 = vunpack.c.l.b16 %v1069
          %v1089 = vunpack.c.h.b16 %v1069
          %v1090 = vunpack.c.l.b16 %v1070
          %v1091 = vunpack.c.h.b16 %v1070
          %v1092 = vunpack.c.l.b16 %v1071
          %v1093 = vunpack.c.h.b16 %v1071
          %v1094 = vunpack.c.l.b16 %v1072
          %v1095 = vunpack.c.h.b16 %v1072
          %v1096 = vunpack.c.l.b16 %v1073
          %v1097 = vunpack.c.h.b16 %v1073
          %v1098 = vpack.c.b16 %v1082, %v1082
          %v1099 = vpack.c.b16 %v1083, %v1083
          %v1100 = vpack.c.b16 %v1084, %v1084
          %v1101 = vpack.c.b16 %v1085, %v1085
          %v1102 = vpack.c.b16 %v1086, %v1086
          %v1103 = vpack.c.b16 %v1087, %v1087
          %v1104 = vpack.c.b16 %v1088, %v1088
          %v1105 = vpack.c.b16 %v1089, %v1089
          %v1106 = vpack.c.b16 %v1090, %v1090
          %v1107 = vpack.c.b16 %v1091, %v1091
          %v1108 = vpack.c.b16 %v1092, %v1092
          %v1109 = vpack.c.b16 %v1093, %v1093
          %v1110 = vpack.c.b16 %v1094, %v1094
          %v1111 = vpack.c.b16 %v1095, %v1095
          %v1112 = vpack.c.b16 %v1096, %v1096
          %v1113 = vpack.c.b16 %v1097, %v1097
          %1130 = vst [vmem:[%s407] sm:$0xf] %v1098
          %1131 = vst [vmem:[%s407 + $0x4] sm:$0xf] %v1099
          %1132 = vst [vmem:[%s407 + $0x8] sm:$0xf] %v1100
          %1133 = vst [vmem:[%s407 + $0xc] sm:$0xf] %v1101
          %1134 = vst [vmem:[%s407 + $0x10] sm:$0xf] %v1102
          %1135 = vst [vmem:[%s407 + $0x14] sm:$0xf] %v1103
          %1136 = vst [vmem:[%s407 + $0x18] sm:$0xf] %v1104
          %1137 = vst [vmem:[%s407 + $0x1c] sm:$0xf] %v1105
          %1138 = vst [vmem:[%s407 + $0x20] sm:$0xf] %v1106
          %1139 = vst [vmem:[%s407 + $0x24] sm:$0xf] %v1107
          %1140 = vst [vmem:[%s407 + $0x28] sm:$0xf] %v1108
          %1141 = vst [vmem:[%s407 + $0x2c] sm:$0xf] %v1109
          %1142 = vst [vmem:[%s407 + $0x30] sm:$0xf] %v1110
          %1143 = vst [vmem:[%s407 + $0x34] sm:$0xf] %v1111
          %1144 = vst [vmem:[%s407 + $0x38] sm:$0xf] %v1112
          %1145 = vst [vmem:[%s407 + $0x3c] sm:$0xf] %v1113
        $region101: #{tpu_custom_call.1} parent=76 // pred_fallthru
          _
        %s1146 = sand.u32 %s176, 1
        %s1147 = scalar_lea.sflag [#allocation9], %s1146
        %s1148 = sand.u32 %s176, 1
        %s1149 = smul.addr %s1148, 64
        %s1150 = scalar_lea.vmem [#allocation12], %s1149
        // Predicated region
        $region102: #{tpu_custom_call.1} parent=76 // pred_check
          %p1151 = pneg %p186
        $region103: #{tpu_custom_call.1} parent=76 // pred_check_branch
          %1153 = sbr.rel (%p1151) target = $region105
        $region104: #{tpu_custom_call.1} parent=76 // pred_region
          %s1154 = smul.u32 16, %s37
          %s1156 = ssub.s32 1024, 1024
          %1157 = vsyncadd %s1147, %s1156
          %s1158 = smul.addr %s1154, 64
          %s1159 = scalar_lea.hbm %s7, %s1158
          %s1160 = sshll.u32 %s1150, 4
          %s1161 = int_to_ptr.vmem [resolvable:$true] %s1160
          %1166 = dma.vmem_to_hbm [thread:$0]  %s1161, 1024, %s1159, %s1147, 64, 64, 4
        $region105: #{tpu_custom_call.1} parent=76 // pred_fallthru
          _
      $region77: #{tpu_custom_call.1} parent=5 // pred_fallthru
        _
      %p1167 = scmp.le.s32.totalorder 2, %s28
      // Predicated region
      $region106: #{tpu_custom_call.1} parent=5 // pred_check
        %p1168 = pneg %p1167
      $region107: #{tpu_custom_call.1} parent=5 // pred_check_branch
        %1170 = sbr.rel (%p1168) target = $region109
      $region108: #{tpu_custom_call.1} parent=5 // pred_region
        %s1171 = ssub.s32 %s28, 2
        // Predicated region
        $region110: #{tpu_custom_call.1} parent=108 // pred_check
          %p1172 = pneg %p192
        $region111: #{tpu_custom_call.1} parent=108 // pred_check_branch
          %1174 = sbr.rel (%p1172) target = $region113
        $region112: #{tpu_custom_call.1} parent=108 // pred_region
          %s1175 = sand.u32 %s177, 1
          %s1176 = scalar_lea.sflag [#allocation9], %s1175
          %s1177 = sand.u32 %s177, 1
          %s1178 = smul.addr %s1177, 64
          %s1179 = scalar_lea.vmem [#allocation12], %s1178
          %1180 = dma.done %s1176, 1024
        $region113: #{tpu_custom_call.1} parent=108 // pred_fallthru
          _
      $region109: #{tpu_custom_call.1} parent=5 // pred_fallthru
        _
    $region6: #{tpu_custom_call.1} parent=1 // loop_footer
      %s32 = sadd.s32 1, %s28
    $region7: #{tpu_custom_call.1} parent=1 // loop_footer_branch
      %27 = sbr.rel target = $region3
    $region8: #{tpu_custom_call.1} parent=1 // loop_exit
      _
    %1181 = vsyncpa [#allocation8], 1
    %s1182 = scalar_lea.sflag [#allocation8], 1
    %1183 = vsyncpa %s1182, 1
    %1184 = vsyncpa [#allocation11], 1
    %1185 = vsyncpa [#allocation9], 1
    %s1186 = scalar_lea.sflag [#allocation9], 1
    %1187 = vsyncpa %s1186, 1

</llo_original>
